<compile_context>
chip_gen: v7x
topology: tpu7x:2x2x1
jax: 0.10.0
libtpu: 0.0.40
codegen_flags: <defaults>
</compile_context>

<pallas_src>
import functools

import jax
import jax.numpy as jnp
from jax import lax
from jax.experimental import pallas as pl
from jax.experimental.pallas import tpu as pltpu

_IN_FEATURES = 4
_OUT_FEATURES = 2
_SAMPLES_PER_ROW = 64                             # 64*4 = 256 in-lanes, 64*2 = 128 out-lanes
_IN_LANES = _SAMPLES_PER_ROW * _IN_FEATURES       # 256
_OUT_LANES = _SAMPLES_PER_ROW * _OUT_FEATURES     # 128
_PALLAS_MIN_BATCH = 4096     # below this, one fused XLA affine pass wins on dispatch cost
_MAX_BLOCK_ROWS = 4096       # 2x(in+out) tiles ~12.3 MiB < v5e's 16 MiB scoped-VMEM default


def _round_up(n, m):
    return -(-n // m) * m


def _fused_affine_kernel(x_ref, m_ref, b_ref, z_ref):
    """z = x @ M + b on lane-dense flat views.

    x_ref: (tr, 256) f32  -- 64 samples/row, 4 features interleaved on lanes
    m_ref: (256, 128) f32 -- block-diagonal: 64 copies of (W2@W1)^T (4x2)
    b_ref: (1, 128)  f32  -- [b0, b1] tiled 64x (matches output interleave)
    z_ref: (tr, 128) f32  -- 64 samples/row, (z0, z1) interleaved on lanes
    """
    z_ref[...] = (
        jnp.dot(
            x_ref[...],
            m_ref[...],
            preferred_element_type=jnp.float32,
            precision=lax.Precision.HIGHEST,
        )
        + b_ref[...]
    )


def deepspeed_test_m(x, w1, b1, w2, b2, *, block_rows=2048, force_pallas=False):
    """Pallas implementation of DeepSpeedTestM.forward.

    x : (B, 4) float32
    w1: (4, 4), b1: (4,)   -- q_proj   (torch nn.Linear layout: (out, in))
    w2: (2, 4), b2: (2,)   -- out_proj
    returns (B, 2) float32 == (x @ w1.T + b1) @ w2.T + b2
    """
    B, F = x.shape
    assert F == _IN_FEATURES, f"expected {_IN_FEATURES} input features, got {F}"
    f32 = jnp.float32
    x = x.astype(f32)
    w1, b1 = w1.astype(f32), b1.astype(f32)
    w2, b2 = w2.astype(f32), b2.astype(f32)

    # Algebraic fusion of Linear∘Linear (no nonlinearity between them):
    #   z = (x W1^T + b1) W2^T + b2 = x (W2 W1)^T + (W2 b1 + b2)
    w_f = w2 @ w1                  # (2, 4)
    b_f = w2 @ b1 + b2             # (2,)

    if B < _PALLAS_MIN_BATCH and not force_pallas:
        # One fused XLA affine pass already sits at the HBM roofline here.
        return x @ w_f.T + b_f

    # ---- lane-dense flat views (zero-copy reshapes of row-major data) ----
    b_padded = _round_up(B, _SAMPLES_PER_ROW)
    if b_padded != B:
        # Only when B % 64 != 0: tiny tail pad so the flat view exists.
        x = jnp.pad(x, ((0, b_padded - B), (0, 0)))
    rows = b_padded // _SAMPLES_PER_ROW
    x_flat = x.reshape(rows, _IN_LANES)            # (R, 256), no data movement

    # Block-diagonal fused weight M[4u+k, 2u+j] = Wf[j, k]; interleaved bias row.
    m_mat = jnp.kron(jnp.eye(_SAMPLES_PER_ROW, dtype=f32), w_f.T)    # (256, 128)
    b_row = jnp.tile(b_f, _SAMPLES_PER_ROW).reshape(1, _OUT_LANES)   # (1, 128)

    # ---- row-block sizing ----
    block_rows = max(8, min(_round_up(block_rows, 8), _MAX_BLOCK_ROWS))
    if rows <= 8:
        tr = rows                                  # single full-extent block
    else:
        # Keep >= 2 blocks so the "parallel" axis can use both v7x TensorCores.
        tr = min(block_rows, _round_up(pl.cdiv(rows, 2), 8))
    grid = (pl.cdiv(rows, tr),)                    # ragged tail clipped by Pallas

    z_flat = pl.pallas_call(
        _fused_affine_kernel,
        out_shape=jax.ShapeDtypeStruct((rows, _OUT_LANES), f32),
        grid=grid,
        in_specs=[
            pl.BlockSpec((tr, _IN_LANES), lambda i: (i, 0)),          # x tile
            pl.BlockSpec((_IN_LANES, _OUT_LANES), lambda i: (0, 0)),  # fused weight (const)
            pl.BlockSpec((1, _OUT_LANES), lambda i: (0, 0)),          # fused bias   (const)
        ],
        out_specs=pl.BlockSpec((tr, _OUT_LANES), lambda i: (i, 0)),   # z tile
        compiler_params=pltpu.CompilerParams(
            dimension_semantics=("parallel",)),
    )(x_flat, m_mat, b_row)

    z = z_flat.reshape(b_padded, _OUT_FEATURES)    # zero-copy
    if b_padded != B:
        z = z[:B]
    return z


def _reference(x, w1, b1, w2, b2):
    y = x @ w1.T + b1
    return y @ w2.T + b2


if __name__ == "__main__":
    key = jax.random.PRNGKey(0)
    k_x, k_w1, k_b1, k_w2, k_b2 = jax.random.split(key, 5)

    # nn.Linear(4,4) / nn.Linear(4,2) parameters (torch (out, in) layout).
    w1 = jax.random.normal(k_w1, (4, 4), dtype=jnp.float32) * 0.5
    b1 = jax.random.normal(k_b1, (4,), dtype=jnp.float32) * 0.1
    w2 = jax.random.normal(k_w2, (2, 4), dtype=jnp.float32) * 0.5
    b2 = jax.random.normal(k_b2, (2,), dtype=jnp.float32) * 0.1

    run_pallas = jax.jit(
        functools.partial(deepspeed_test_m, block_rows=2048, force_pallas=True))

    # 1) Multi-block grid, exactly divisible: B=1024 -> 16 rows, 2 blocks of 8.
    xa = jax.random.normal(k_x, (1024, _IN_FEATURES), dtype=jnp.float32)
    za = jax.block_until_ready(run_pallas(xa, w1, b1, w2, b2))
    assert za.shape == (1024, _OUT_FEATURES)
    assert jnp.allclose(za, _reference(xa, w1, b1, w2, b2), atol=3e-5, rtol=3e-5)

    # 2) Ragged grid: B=1600 -> 25 rows, 16-row blocks, clipped tail block.
    xb = jax.random.normal(jax.random.fold_in(k_x, 1), (1600, _IN_FEATURES),
                           dtype=jnp.float32)
    zb = jax.block_until_ready(run_pallas(xb, w1, b1, w2, b2))
    assert zb.shape == (1600, _OUT_FEATURES)
    assert jnp.allclose(zb, _reference(xb, w1, b1, w2, b2), atol=3e-5, rtol=3e-5)

    # 3) Batch not a multiple of 64: B=300 -> tiny tail pad, single 5-row block.
    xc = jax.random.normal(jax.random.fold_in(k_x, 2), (300, _IN_FEATURES),
                           dtype=jnp.float32)
    zc = jax.block_until_ready(run_pallas(xc, w1, b1, w2, b2))
    assert zc.shape == (300, _OUT_FEATURES)
    assert jnp.allclose(zc, _reference(xc, w1, b1, w2, b2), atol=3e-5, rtol=3e-5)

    # 4) Small-batch XLA fallback path (no Pallas dispatch).
    zd = deepspeed_test_m(xa[:16], w1, b1, w2, b2)
    assert jnp.allclose(zd, _reference(xa[:16], w1, b1, w2, b2), atol=3e-5, rtol=3e-5)

    print("KERNEL_OK")
</pallas_src>

<mosaic_0001>
module attributes {stable_mosaic.version = 11 : i64} {
  func.func @_fused_affine_kernel(%arg0: i32, %arg1: memref<8x256xf32, #tpu.memory_space<vmem>>, %arg2: memref<256x128xf32, #tpu.memory_space<vmem>>, %arg3: memref<1x128xf32, #tpu.memory_space<vmem>>, %arg4: memref<8x128xf32, #tpu.memory_space<vmem>>) attributes {dimension_semantics = [#tpu.dimension_semantics<parallel>], iteration_bounds = array<i64: 2>, scalar_prefetch = 0 : i64, scratch_operands = 0 : i64, tpu.core_type = #tpu.core_type<tc>, window_params = [{transform_indices = @transform_0, window_bounds = array<i64: 8, 256>}, {pipeline_mode = #tpu.pipeline_mode<synchronous>, transform_indices = @transform_1, window_bounds = array<i64: 256, 128>}, {pipeline_mode = #tpu.pipeline_mode<synchronous>, transform_indices = @transform_2, window_bounds = array<i64: 1, 128>}, {transform_indices = @transform_3, window_bounds = array<i64: 8, 128>}]} {
    %c0 = arith.constant 0 : index
    %c0_0 = arith.constant 0 : index
    %0 = vector.load %arg1[%c0, %c0_0] : memref<8x256xf32, #tpu.memory_space<vmem>>, vector<8x256xf32>
    %c0_1 = arith.constant 0 : index
    %c0_2 = arith.constant 0 : index
    %1 = vector.load %arg2[%c0_1, %c0_2] : memref<256x128xf32, #tpu.memory_space<vmem>>, vector<256x128xf32>
    %cst = arith.constant dense<0.000000e+00> : vector<8x128xf32>
    %2 = tpu.matmul %0, %1, %cst {dimension_numbers = #tpu.dot_dimension_numbers<[1], [0], [0], [1], [0, 0, 1, 1], [], []>, precision = #tpu.contract_precision<fp32>} : vector<8x256xf32>, vector<256x128xf32>, vector<8x128xf32> -> vector<8x128xf32>
    %c0_3 = arith.constant 0 : index
    %c0_4 = arith.constant 0 : index
    %3 = vector.load %arg3[%c0_3, %c0_4] : memref<1x128xf32, #tpu.memory_space<vmem>>, vector<1x128xf32>
    %4 = vector.broadcast %3 : vector<1x128xf32> to vector<8x128xf32>
    %5 = arith.addf %2, %4 : vector<8x128xf32>
    %c0_5 = arith.constant 0 : index
    %c0_6 = arith.constant 0 : index
    %6 = vector.load %arg4[%c0_5, %c0_6] : memref<8x128xf32, #tpu.memory_space<vmem>>, vector<8x128xf32>
    tpu.vector_store %arg4[%c0_5, %c0_6], %5 {strides = array<i32>} : memref<8x128xf32, #tpu.memory_space<vmem>>, vector<8x128xf32>,
    return
  }
  func.func @transform_0(%arg0: i32) -> (i32, i32) {
    %c0_i32 = arith.constant 0 : i32
    %c0_i32_0 = arith.constant 0 : i32
    return %arg0, %c0_i32 : i32, i32
  }
  func.func @transform_1(%arg0: i32) -> (i32, i32) {
    %c0_i32 = arith.constant 0 : i32
    %c0_i32_0 = arith.constant 0 : i32
    %c0_i32_1 = arith.constant 0 : i32
    return %c0_i32, %c0_i32_0 : i32, i32
  }
  func.func @transform_2(%arg0: i32) -> (i32, i32) {
    %c0_i32 = arith.constant 0 : i32
    %c0_i32_0 = arith.constant 0 : i32
    %c0_i32_1 = arith.constant 0 : i32
    return %c0_i32, %c0_i32_0 : i32, i32
  }
  func.func @transform_3(%arg0: i32) -> (i32, i32) {
    %c0_i32 = arith.constant 0 : i32
    %c0_i32_0 = arith.constant 0 : i32
    return %arg0, %c0_i32 : i32, i32
  }
}

</mosaic_0001>

<llo_original>
// kernel: tile.8
$region0: #{tile.8}
  #allocation0 [shape = 's32[1]{0}', space=sflag, size = 0x4, scoped, tag = 'scoped memory for tile.8']
  %s0 = inlined_call_operand.vmem [shape: f32[2], index: 0, kind: input, shape index: {}]
  %s1 = inlined_call_operand.vmem [shape: f32[64,2], index: 1, kind: output, shape index: {}]
  // Predicated region
  $region2: #{tile.8} parent=0 // pred_check
    _
  $region3: #{tile.8} parent=0 // pred_check_branch
    %3 = sbr.rel (0) target = $region5
  $region4: #{tile.8} parent=0 // pred_region
    _
  $region5: #{tile.8} parent=0 // pred_fallthru
    _
  %v4 = vld [vmem:[%s0] ss:$0 sm:$0xff]
  %5 = vst [vmem:[%s1] sm:$0xff] %v4
  %s6 = scalar_lea.vmem %s1, 8
  %7 = vst [vmem:[%s6] sm:$0xff] %v4
  %s8 = scalar_lea.vmem %s1, 16
  %9 = vst [vmem:[%s8] sm:$0xff] %v4
  %s10 = scalar_lea.vmem %s1, 24
  %11 = vst [vmem:[%s10] sm:$0xff] %v4
  %s12 = scalar_lea.vmem %s1, 32
  %13 = vst [vmem:[%s12] sm:$0xff] %v4
  %s14 = scalar_lea.vmem %s1, 40
  %15 = vst [vmem:[%s14] sm:$0xff] %v4
  %s16 = scalar_lea.vmem %s1, 48
  %17 = vst [vmem:[%s16] sm:$0xff] %v4
  %s18 = scalar_lea.vmem %s1, 56
  %19 = vst [vmem:[%s18] sm:$0xff] %v4

// kernel: tile.9
$region0: #{tile.9}
  %s0 = inlined_call_operand.vmem [shape: f32[64,2], index: 0, kind: input, shape index: {}]
  %s1 = inlined_call_operand.vmem [shape: f32[1,128], index: 1, kind: output, shape index: {}]
  $region1: #{tile.9} parent=0
    #allocation0 [shape = 'u8[4096]{0}', space=vmem, size = 0x1000, scoped, tag = 'scoped mem for output reshape']
    %v2 = vld [vmem:[%s0] sm:$0x1]
    %vm3 = vcmask 15360
    %4 = vst.msk [vmem:[#allocation0] sm:$0x1] %vm3, %v2
    %s5 = scalar_lea.vmem %s0, 63
    %v6 = vld [vmem:[%s5] sm:$0x1]
    %7 = vrot.lane.b32.xlu0 %v6, 126
    %v8 = vpop.permute.xlu0 %7
    %vm9 = vcmask 1048560
    %10 = vst.msk [vmem:[#allocation0] sm:$0x1] %vm9, %v8
    %s11 = scalar_lea.vmem %s0, 62
    %v12 = vld [vmem:[%s11] sm:$0x1]
    %13 = vrot.lane.b32.xlu0 %v12, 124
    %v14 = vpop.permute.xlu0 %13
    %vm15 = vcmask 1032160
    %16 = vst.msk [vmem:[#allocation0] sm:$0x1] %vm15, %v14
    %s17 = scalar_lea.vmem %s0, 61
    %v18 = vld [vmem:[%s17] sm:$0x1]
    %19 = vrot.lane.b32.xlu0 %v18, 122
    %v20 = vpop.permute.xlu0 %19
    %vm21 = vcmask 1015760
    %22 = vst.msk [vmem:[#allocation0] sm:$0x1] %vm21, %v20
    %s23 = scalar_lea.vmem %s0, 60
    %v24 = vld [vmem:[%s23] sm:$0x1]
    %25 = vrot.lane.b32.xlu0 %v24, 120
    %v26 = vpop.permute.xlu0 %25
    %vm27 = vcmask 999360
    %28 = vst.msk [vmem:[#allocation0] sm:$0x1] %vm27, %v26
    %s29 = scalar_lea.vmem %s0, 59
    %v30 = vld [vmem:[%s29] sm:$0x1]
    %31 = vrot.lane.b32.xlu0 %v30, 118
    %v32 = vpop.permute.xlu0 %31
    %vm33 = vcmask 982960
    %34 = vst.msk [vmem:[#allocation0] sm:$0x1] %vm33, %v32
    %s35 = scalar_lea.vmem %s0, 58
    %v36 = vld [vmem:[%s35] sm:$0x1]
    %37 = vrot.lane.b32.xlu0 %v36, 116
    %v38 = vpop.permute.xlu0 %37
    %vm39 = vcmask 966560
    %40 = vst.msk [vmem:[#allocation0] sm:$0x1] %vm39, %v38
    %s41 = scalar_lea.vmem %s0, 57
    %v42 = vld [vmem:[%s41] sm:$0x1]
    %43 = vrot.lane.b32.xlu0 %v42, 114
    %v44 = vpop.permute.xlu0 %43
    %vm45 = vcmask 950160
    %46 = vst.msk [vmem:[#allocation0] sm:$0x1] %vm45, %v44
    %s47 = scalar_lea.vmem %s0, 56
    %v48 = vld [vmem:[%s47] sm:$0x1]
    %49 = vrot.lane.b32.xlu0 %v48, 112
    %v50 = vpop.permute.xlu0 %49
    %vm51 = vcmask 933760
    %52 = vst.msk [vmem:[#allocation0] sm:$0x1] %vm51, %v50
    %s53 = scalar_lea.vmem %s0, 55
    %v54 = vld [vmem:[%s53] sm:$0x1]
    %55 = vrot.lane.b32.xlu0 %v54, 110
    %v56 = vpop.permute.xlu0 %55
    %vm57 = vcmask 917360
    %58 = vst.msk [vmem:[#allocation0] sm:$0x1] %vm57, %v56
    %s59 = scalar_lea.vmem %s0, 54
    %v60 = vld [vmem:[%s59] sm:$0x1]
    %61 = vrot.lane.b32.xlu0 %v60, 108
    %v62 = vpop.permute.xlu0 %61
    %vm63 = vcmask 900960
    %64 = vst.msk [vmem:[#allocation0] sm:$0x1] %vm63, %v62
    %s65 = scalar_lea.vmem %s0, 53
    %v66 = vld [vmem:[%s65] sm:$0x1]
    %67 = vrot.lane.b32.xlu0 %v66, 106
    %v68 = vpop.permute.xlu0 %67
    %vm69 = vcmask 884560
    %70 = vst.msk [vmem:[#allocation0] sm:$0x1] %vm69, %v68
    %s71 = scalar_lea.vmem %s0, 52
    %v72 = vld [vmem:[%s71] sm:$0x1]
    %73 = vrot.lane.b32.xlu0 %v72, 104
    %v74 = vpop.permute.xlu0 %73
    %vm75 = vcmask 868160
    %76 = vst.msk [vmem:[#allocation0] sm:$0x1] %vm75, %v74
    %s77 = scalar_lea.vmem %s0, 51
    %v78 = vld [vmem:[%s77] sm:$0x1]
    %79 = vrot.lane.b32.xlu0 %v78, 102
    %v80 = vpop.permute.xlu0 %79
    %vm81 = vcmask 851760
    %82 = vst.msk [vmem:[#allocation0] sm:$0x1] %vm81, %v80
    %s83 = scalar_lea.vmem %s0, 50
    %v84 = vld [vmem:[%s83] sm:$0x1]
    %85 = vrot.lane.b32.xlu0 %v84, 100
    %v86 = vpop.permute.xlu0 %85
    %vm87 = vcmask 835360
    %88 = vst.msk [vmem:[#allocation0] sm:$0x1] %vm87, %v86
    %s89 = scalar_lea.vmem %s0, 49
    %v90 = vld [vmem:[%s89] sm:$0x1]
    %91 = vrot.lane.b32.xlu0 %v90, 98
    %v92 = vpop.permute.xlu0 %91
    %vm93 = vcmask 818960
    %94 = vst.msk [vmem:[#allocation0] sm:$0x1] %vm93, %v92
    %s95 = scalar_lea.vmem %s0, 48
    %v96 = vld [vmem:[%s95] sm:$0x1]
    %97 = vrot.lane.b32.xlu0 %v96, 96
    %v98 = vpop.permute.xlu0 %97
    %vm99 = vcmask 802560
    %100 = vst.msk [vmem:[#allocation0] sm:$0x1] %vm99, %v98
    %s101 = scalar_lea.vmem %s0, 47
    %v102 = vld [vmem:[%s101] sm:$0x1]
    %103 = vrot.lane.b32.xlu0 %v102, 94
    %v104 = vpop.permute.xlu0 %103
    %vm105 = vcmask 786160
    %106 = vst.msk [vmem:[#allocation0] sm:$0x1] %vm105, %v104
    %s107 = scalar_lea.vmem %s0, 46
    %v108 = vld [vmem:[%s107] sm:$0x1]
    %109 = vrot.lane.b32.xlu0 %v108, 92
    %v110 = vpop.permute.xlu0 %109
    %vm111 = vcmask 769760
    %112 = vst.msk [vmem:[#allocation0] sm:$0x1] %vm111, %v110
    %s113 = scalar_lea.vmem %s0, 45
    %v114 = vld [vmem:[%s113] sm:$0x1]
    %115 = vrot.lane.b32.xlu0 %v114, 90
    %v116 = vpop.permute.xlu0 %115
    %vm117 = vcmask 753360
    %118 = vst.msk [vmem:[#allocation0] sm:$0x1] %vm117, %v116
    %s119 = scalar_lea.vmem %s0, 44
    %v120 = vld [vmem:[%s119] sm:$0x1]
    %121 = vrot.lane.b32.xlu0 %v120, 88
    %v122 = vpop.permute.xlu0 %121
    %vm123 = vcmask 736960
    %124 = vst.msk [vmem:[#allocation0] sm:$0x1] %vm123, %v122
    %s125 = scalar_lea.vmem %s0, 43
    %v126 = vld [vmem:[%s125] sm:$0x1]
    %127 = vrot.lane.b32.xlu0 %v126, 86
    %v128 = vpop.permute.xlu0 %127
    %vm129 = vcmask 720560
    %130 = vst.msk [vmem:[#allocation0] sm:$0x1] %vm129, %v128
    %s131 = scalar_lea.vmem %s0, 42
    %v132 = vld [vmem:[%s131] sm:$0x1]
    %133 = vrot.lane.b32.xlu0 %v132, 84
    %v134 = vpop.permute.xlu0 %133
    %vm135 = vcmask 704160
    %136 = vst.msk [vmem:[#allocation0] sm:$0x1] %vm135, %v134
    %s137 = scalar_lea.vmem %s0, 41
    %v138 = vld [vmem:[%s137] sm:$0x1]
    %139 = vrot.lane.b32.xlu0 %v138, 82
    %v140 = vpop.permute.xlu0 %139
    %vm141 = vcmask 687760
    %142 = vst.msk [vmem:[#allocation0] sm:$0x1] %vm141, %v140
    %s143 = scalar_lea.vmem %s0, 40
    %v144 = vld [vmem:[%s143] sm:$0x1]
    %145 = vrot.lane.b32.xlu0 %v144, 80
    %v146 = vpop.permute.xlu0 %145
    %vm147 = vcmask 671360
    %148 = vst.msk [vmem:[#allocation0] sm:$0x1] %vm147, %v146
    %s149 = scalar_lea.vmem %s0, 39
    %v150 = vld [vmem:[%s149] sm:$0x1]
    %151 = vrot.lane.b32.xlu0 %v150, 78
    %v152 = vpop.permute.xlu0 %151
    %vm153 = vcmask 654960
    %154 = vst.msk [vmem:[#allocation0] sm:$0x1] %vm153, %v152
    %s155 = scalar_lea.vmem %s0, 38
    %v156 = vld [vmem:[%s155] sm:$0x1]
    %157 = vrot.lane.b32.xlu0 %v156, 76
    %v158 = vpop.permute.xlu0 %157
    %vm159 = vcmask 638560
    %160 = vst.msk [vmem:[#allocation0] sm:$0x1] %vm159, %v158
    %s161 = scalar_lea.vmem %s0, 37
    %v162 = vld [vmem:[%s161] sm:$0x1]
    %163 = vrot.lane.b32.xlu0 %v162, 74
    %v164 = vpop.permute.xlu0 %163
    %vm165 = vcmask 622160
    %166 = vst.msk [vmem:[#allocation0] sm:$0x1] %vm165, %v164
    %s167 = scalar_lea.vmem %s0, 36
    %v168 = vld [vmem:[%s167] sm:$0x1]
    %169 = vrot.lane.b32.xlu0 %v168, 72
    %v170 = vpop.permute.xlu0 %169
    %vm171 = vcmask 605760
    %172 = vst.msk [vmem:[#allocation0] sm:$0x1] %vm171, %v170
    %s173 = scalar_lea.vmem %s0, 35
    %v174 = vld [vmem:[%s173] sm:$0x1]
    %175 = vrot.lane.b32.xlu0 %v174, 70
    %v176 = vpop.permute.xlu0 %175
    %vm177 = vcmask 589360
    %178 = vst.msk [vmem:[#allocation0] sm:$0x1] %vm177, %v176
    %s179 = scalar_lea.vmem %s0, 34
    %v180 = vld [vmem:[%s179] sm:$0x1]
    %181 = vrot.lane.b32.xlu0 %v180, 68
    %v182 = vpop.permute.xlu0 %181
    %vm183 = vcmask 572960
    %184 = vst.msk [vmem:[#allocation0] sm:$0x1] %vm183, %v182
    %s185 = scalar_lea.vmem %s0, 33
    %v186 = vld [vmem:[%s185] sm:$0x1]
    %187 = vrot.lane.b32.xlu0 %v186, 66
    %v188 = vpop.permute.xlu0 %187
    %vm189 = vcmask 556560
    %190 = vst.msk [vmem:[#allocation0] sm:$0x1] %vm189, %v188
    %s191 = scalar_lea.vmem %s0, 32
    %v192 = vld [vmem:[%s191] sm:$0x1]
    %193 = vrot.lane.b32.xlu0 %v192, 64
    %v194 = vpop.permute.xlu0 %193
    %vm195 = vcmask 540160
    %196 = vst.msk [vmem:[#allocation0] sm:$0x1] %vm195, %v194
    %s197 = scalar_lea.vmem %s0, 31
    %v198 = vld [vmem:[%s197] sm:$0x1]
    %199 = vrot.lane.b32.xlu0 %v198, 62
    %v200 = vpop.permute.xlu0 %199
    %vm201 = vcmask 523760
    %202 = vst.msk [vmem:[#allocation0] sm:$0x1] %vm201, %v200
    %s203 = scalar_lea.vmem %s0, 30
    %v204 = vld [vmem:[%s203] sm:$0x1]
    %205 = vrot.lane.b32.xlu0 %v204, 60
    %v206 = vpop.permute.xlu0 %205
    %vm207 = vcmask 507360
    %208 = vst.msk [vmem:[#allocation0] sm:$0x1] %vm207, %v206
    %s209 = scalar_lea.vmem %s0, 29
    %v210 = vld [vmem:[%s209] sm:$0x1]
    %211 = vrot.lane.b32.xlu0 %v210, 58
    %v212 = vpop.permute.xlu0 %211
    %vm213 = vcmask 490960
    %214 = vst.msk [vmem:[#allocation0] sm:$0x1] %vm213, %v212
    %s215 = scalar_lea.vmem %s0, 28
    %v216 = vld [vmem:[%s215] sm:$0x1]
    %217 = vrot.lane.b32.xlu0 %v216, 56
    %v218 = vpop.permute.xlu0 %217
    %vm219 = vcmask 474560
    %220 = vst.msk [vmem:[#allocation0] sm:$0x1] %vm219, %v218
    %s221 = scalar_lea.vmem %s0, 27
    %v222 = vld [vmem:[%s221] sm:$0x1]
    %223 = vrot.lane.b32.xlu0 %v222, 54
    %v224 = vpop.permute.xlu0 %223
    %vm225 = vcmask 458160
    %226 = vst.msk [vmem:[#allocation0] sm:$0x1] %vm225, %v224
    %s227 = scalar_lea.vmem %s0, 26
    %v228 = vld [vmem:[%s227] sm:$0x1]
    %229 = vrot.lane.b32.xlu0 %v228, 52
    %v230 = vpop.permute.xlu0 %229
    %vm231 = vcmask 441760
    %232 = vst.msk [vmem:[#allocation0] sm:$0x1] %vm231, %v230
    %s233 = scalar_lea.vmem %s0, 25
    %v234 = vld [vmem:[%s233] sm:$0x1]
    %235 = vrot.lane.b32.xlu0 %v234, 50
    %v236 = vpop.permute.xlu0 %235
    %vm237 = vcmask 425360
    %238 = vst.msk [vmem:[#allocation0] sm:$0x1] %vm237, %v236
    %s239 = scalar_lea.vmem %s0, 24
    %v240 = vld [vmem:[%s239] sm:$0x1]
    %241 = vrot.lane.b32.xlu0 %v240, 48
    %v242 = vpop.permute.xlu0 %241
    %vm243 = vcmask 408960
    %244 = vst.msk [vmem:[#allocation0] sm:$0x1] %vm243, %v242
    %s245 = scalar_lea.vmem %s0, 23
    %v246 = vld [vmem:[%s245] sm:$0x1]
    %247 = vrot.lane.b32.xlu0 %v246, 46
    %v248 = vpop.permute.xlu0 %247
    %vm249 = vcmask 392560
    %250 = vst.msk [vmem:[#allocation0] sm:$0x1] %vm249, %v248
    %s251 = scalar_lea.vmem %s0, 22
    %v252 = vld [vmem:[%s251] sm:$0x1]
    %253 = vrot.lane.b32.xlu0 %v252, 44
    %v254 = vpop.permute.xlu0 %253
    %vm255 = vcmask 376160
    %256 = vst.msk [vmem:[#allocation0] sm:$0x1] %vm255, %v254
    %s257 = scalar_lea.vmem %s0, 21
    %v258 = vld [vmem:[%s257] sm:$0x1]
    %259 = vrot.lane.b32.xlu0 %v258, 42
    %v260 = vpop.permute.xlu0 %259
    %vm261 = vcmask 359760
    %262 = vst.msk [vmem:[#allocation0] sm:$0x1] %vm261, %v260
    %s263 = scalar_lea.vmem %s0, 20
    %v264 = vld [vmem:[%s263] sm:$0x1]
    %265 = vrot.lane.b32.xlu0 %v264, 40
    %v266 = vpop.permute.xlu0 %265
    %vm267 = vcmask 343360
    %268 = vst.msk [vmem:[#allocation0] sm:$0x1] %vm267, %v266
    %s269 = scalar_lea.vmem %s0, 19
    %v270 = vld [vmem:[%s269] sm:$0x1]
    %271 = vrot.lane.b32.xlu0 %v270, 38
    %v272 = vpop.permute.xlu0 %271
    %vm273 = vcmask 326960
    %274 = vst.msk [vmem:[#allocation0] sm:$0x1] %vm273, %v272
    %s275 = scalar_lea.vmem %s0, 18
    %v276 = vld [vmem:[%s275] sm:$0x1]
    %277 = vrot.lane.b32.xlu0 %v276, 36
    %v278 = vpop.permute.xlu0 %277
    %vm279 = vcmask 310560
    %280 = vst.msk [vmem:[#allocation0] sm:$0x1] %vm279, %v278
    %s281 = scalar_lea.vmem %s0, 17
    %v282 = vld [vmem:[%s281] sm:$0x1]
    %283 = vrot.lane.b32.xlu0 %v282, 34
    %v284 = vpop.permute.xlu0 %283
    %vm285 = vcmask 294160
    %286 = vst.msk [vmem:[#allocation0] sm:$0x1] %vm285, %v284
    %s287 = scalar_lea.vmem %s0, 16
    %v288 = vld [vmem:[%s287] sm:$0x1]
    %289 = vrot.lane.b32.xlu0 %v288, 32
    %v290 = vpop.permute.xlu0 %289
    %vm291 = vcmask 277760
    %292 = vst.msk [vmem:[#allocation0] sm:$0x1] %vm291, %v290
    %s293 = scalar_lea.vmem %s0, 15
    %v294 = vld [vmem:[%s293] sm:$0x1]
    %295 = vrot.lane.b32.xlu0 %v294, 30
    %v296 = vpop.permute.xlu0 %295
    %vm297 = vcmask 261360
    %298 = vst.msk [vmem:[#allocation0] sm:$0x1] %vm297, %v296
    %s299 = scalar_lea.vmem %s0, 14
    %v300 = vld [vmem:[%s299] sm:$0x1]
    %301 = vrot.lane.b32.xlu0 %v300, 28
    %v302 = vpop.permute.xlu0 %301
    %vm303 = vcmask 244960
    %304 = vst.msk [vmem:[#allocation0] sm:$0x1] %vm303, %v302
    %s305 = scalar_lea.vmem %s0, 13
    %v306 = vld [vmem:[%s305] sm:$0x1]
    %307 = vrot.lane.b32.xlu0 %v306, 26
    %v308 = vpop.permute.xlu0 %307
    %vm309 = vcmask 228560
    %310 = vst.msk [vmem:[#allocation0] sm:$0x1] %vm309, %v308
    %s311 = scalar_lea.vmem %s0, 12
    %v312 = vld [vmem:[%s311] sm:$0x1]
    %313 = vrot.lane.b32.xlu0 %v312, 24
    %v314 = vpop.permute.xlu0 %313
    %vm315 = vcmask 212160
    %316 = vst.msk [vmem:[#allocation0] sm:$0x1] %vm315, %v314
    %s317 = scalar_lea.vmem %s0, 11
    %v318 = vld [vmem:[%s317] sm:$0x1]
    %319 = vrot.lane.b32.xlu0 %v318, 22
    %v320 = vpop.permute.xlu0 %319
    %vm321 = vcmask 195760
    %322 = vst.msk [vmem:[#allocation0] sm:$0x1] %vm321, %v320
    %s323 = scalar_lea.vmem %s0, 10
    %v324 = vld [vmem:[%s323] sm:$0x1]
    %325 = vrot.lane.b32.xlu0 %v324, 20
    %v326 = vpop.permute.xlu0 %325
    %vm327 = vcmask 179360
    %328 = vst.msk [vmem:[#allocation0] sm:$0x1] %vm327, %v326
    %s329 = scalar_lea.vmem %s0, 9
    %v330 = vld [vmem:[%s329] sm:$0x1]
    %331 = vrot.lane.b32.xlu0 %v330, 18
    %v332 = vpop.permute.xlu0 %331
    %vm333 = vcmask 162960
    %334 = vst.msk [vmem:[#allocation0] sm:$0x1] %vm333, %v332
    %s335 = scalar_lea.vmem %s0, 8
    %v336 = vld [vmem:[%s335] sm:$0x1]
    %337 = vrot.lane.b32.xlu0 %v336, 16
    %v338 = vpop.permute.xlu0 %337
    %vm339 = vcmask 146560
    %340 = vst.msk [vmem:[#allocation0] sm:$0x1] %vm339, %v338
    %s341 = scalar_lea.vmem %s0, 7
    %v342 = vld [vmem:[%s341] sm:$0x1]
    %343 = vrot.lane.b32.xlu0 %v342, 14
    %v344 = vpop.permute.xlu0 %343
    %vm345 = vcmask 130160
    %346 = vst.msk [vmem:[#allocation0] sm:$0x1] %vm345, %v344
    %s347 = scalar_lea.vmem %s0, 6
    %v348 = vld [vmem:[%s347] sm:$0x1]
    %349 = vrot.lane.b32.xlu0 %v348, 12
    %v350 = vpop.permute.xlu0 %349
    %vm351 = vcmask 113760
    %352 = vst.msk [vmem:[#allocation0] sm:$0x1] %vm351, %v350
    %s353 = scalar_lea.vmem %s0, 5
    %v354 = vld [vmem:[%s353] sm:$0x1]
    %355 = vrot.lane.b32.xlu0 %v354, 10
    %v356 = vpop.permute.xlu0 %355
    %vm357 = vcmask 97360
    %358 = vst.msk [vmem:[#allocation0] sm:$0x1] %vm357, %v356
    %s359 = scalar_lea.vmem %s0, 4
    %v360 = vld [vmem:[%s359] sm:$0x1]
    %361 = vrot.lane.b32.xlu0 %v360, 8
    %v362 = vpop.permute.xlu0 %361
    %vm363 = vcmask 80960
    %364 = vst.msk [vmem:[#allocation0] sm:$0x1] %vm363, %v362
    %s365 = scalar_lea.vmem %s0, 3
    %v366 = vld [vmem:[%s365] sm:$0x1]
    %367 = vrot.lane.b32.xlu0 %v366, 6
    %v368 = vpop.permute.xlu0 %367
    %vm369 = vcmask 64560
    %370 = vst.msk [vmem:[#allocation0] sm:$0x1] %vm369, %v368
    %s371 = scalar_lea.vmem %s0, 2
    %v372 = vld [vmem:[%s371] sm:$0x1]
    %373 = vrot.lane.b32.xlu0 %v372, 4
    %v374 = vpop.permute.xlu0 %373
    %vm375 = vcmask 48160
    %376 = vst.msk [vmem:[#allocation0] sm:$0x1] %vm375, %v374
    %s377 = scalar_lea.vmem %s0, 1
    %v378 = vld [vmem:[%s377] sm:$0x1]
    %379 = vrot.lane.b32.xlu0 %v378, 2
    %v380 = vpop.permute.xlu0 %379
    %vm381 = vcmask 31760
    %382 = vst.msk [vmem:[#allocation0] sm:$0x1] %vm381, %v380
    %s384 = sshllo.u32 0, 1
    %v386 = vld [vmem:[#allocation0] sm:%s384]
    %s387 = sshllo.u32 0, 1
    %388 = vst [vmem:[%s1] sm:%s387] %v386

// kernel: deepspeed_test_m.1
$region0: #{deepspeed_test_m.1}
  #allocation0 [shape = 'u32[]', space=smem, size = 0x4, offset = 0x4, fixed_abs, tag = 'smem constant byte address 0x4 - core index']
  #allocation1 [shape = 'u32[144,128]{1,0:T(1,128)}', space=vmem, size = 0x12000, scoped, tag = 'internal scratch']
  %s0 = inlined_call_operand.vmem [shape: f32[16,256], index: 0, kind: input, shape index: {}]
  %s1 = inlined_call_operand.vmem [shape: f32[256,128], index: 1, kind: input, shape index: {}]
  %s2 = inlined_call_operand.vmem [shape: f32[1,128], index: 2, kind: input, shape index: {}]
  %s3 = inlined_call_operand.vmem [shape: f32[16,128], index: 3, kind: output, shape index: {}]
  %s4 = sld [smem:[#allocation0]]
  $region45: #{deepspeed_test_m.1} parent=0
    _
  %s6 = ssub.s32 1, %s4
  %s7 = scalar_select 0, %s6, %s4
  loop: start=0, step=1, limit=4
  $region2: #{deepspeed_test_m.1} parent=0 // loop_pre_header
    _
  $region3: #{deepspeed_test_m.1} parent=0 // loop_header
    %s9 = sphi 0, %s13
    %p10 = scmp.ge.s32.totalorder %s9, 4
    %s19 = sphi 0, %s21
    %s22 = sphi 0, %s19
    %s23 = sphi 0, %s22
    %s39 = sphi 0, %s23
    %s43 = sphi 0, %s43
    %s45 = sphi 0, %s43
    %s46 = sphi 0, %s45
    %s60 = sphi 0, %s46
    %s64 = sphi 0, %s64
    %s66 = sphi 0, %s64
    %s67 = sphi 0, %s66
    %s81 = sphi 0, %s67
    %s87 = sphi 0, %s89
    %s90 = sphi 0, %s87
    %s91 = sphi 0, %s90
    %s107 = sphi 0, %s91
  $region4: #{deepspeed_test_m.1} parent=0 // loop_header_branch
    %12 = sbr.rel (%p10) target = $region8
  $region5: #{deepspeed_test_m.1} parent=0 // loop_body
    %s14 = ssub.s32 %s9, 1
    %s15 = ssub.s32 %s9, 2
    %s16 = sadd.s32 %s9, 1
    %s17 = ssub.s32 %s9, %s16
    %p18 = scmp.eq.s32.totalorder %s17, 0
    %s20 = sadd.s32 %s19, 1
    %s21 = scalar_select %p18, %s19, %s20
    %p24 = pneg %p18
    %p25 = scmp.eq.s32.totalorder %s9, 1
    %p26 = por %p24, %p25
    %p27 = scmp.ne.s32.totalorder %s19, %s22
    %p28 = scmp.eq.s32.totalorder %s9, 0
    %p29 = por %p27, %p28
    %p30 = scmp.ne.s32.totalorder %s19, %s22
    %p31 = scmp.eq.s32.totalorder %s14, 1
    %p32 = por %p30, %p31
    %p33 = scmp.ne.s32.totalorder %s22, %s23
    %p34 = scmp.eq.s32.totalorder %s14, 0
    %p35 = por %p33, %p34
    %p36 = scmp.ne.s32.totalorder %s22, %s23
    %p37 = scmp.eq.s32.totalorder %s15, 1
    %p38 = por %p36, %p37
    %p40 = scmp.ne.s32.totalorder %s23, %s39
    %p41 = scmp.eq.s32.totalorder %s15, 0
    %p42 = por %p40, %p41
    %s44 = sadd.s32 %s43, 1
    %p47 = scmp.eq.s32.totalorder %s9, 1
    %p48 = scmp.ne.s32.totalorder %s43, %s45
    %p49 = scmp.eq.s32.totalorder %s9, 0
    %p50 = por %p48, %p49
    %p51 = scmp.ne.s32.totalorder %s43, %s45
    %p52 = scmp.eq.s32.totalorder %s14, 1
    %p53 = por %p51, %p52
    %p54 = scmp.ne.s32.totalorder %s45, %s46
    %p55 = scmp.eq.s32.totalorder %s14, 0
    %p56 = por %p54, %p55
    %p57 = scmp.ne.s32.totalorder %s45, %s46
    %p58 = scmp.eq.s32.totalorder %s15, 1
    %p59 = por %p57, %p58
    %p61 = scmp.ne.s32.totalorder %s46, %s60
    %p62 = scmp.eq.s32.totalorder %s15, 0
    %p63 = por %p61, %p62
    %s65 = sadd.s32 %s64, 1
    %p68 = scmp.eq.s32.totalorder %s9, 1
    %p69 = scmp.ne.s32.totalorder %s64, %s66
    %p70 = scmp.eq.s32.totalorder %s9, 0
    %p71 = por %p69, %p70
    %p72 = scmp.ne.s32.totalorder %s64, %s66
    %p73 = scmp.eq.s32.totalorder %s14, 1
    %p74 = por %p72, %p73
    %p75 = scmp.ne.s32.totalorder %s66, %s67
    %p76 = scmp.eq.s32.totalorder %s14, 0
    %p77 = por %p75, %p76
    %p78 = scmp.ne.s32.totalorder %s66, %s67
    %p79 = scmp.eq.s32.totalorder %s15, 1
    %p80 = por %p78, %p79
    %p82 = scmp.ne.s32.totalorder %s67, %s81
    %p83 = scmp.eq.s32.totalorder %s15, 0
    %p84 = por %p82, %p83
    %s85 = ssub.s32 %s9, %s16
    %p86 = scmp.eq.s32.totalorder %s85, 0
    %s88 = sadd.s32 %s87, 1
    %s89 = scalar_select %p86, %s87, %s88
    %p92 = pneg %p86
    %p93 = scmp.eq.s32.totalorder %s9, 1
    %p94 = por %p92, %p93
    %p95 = scmp.ne.s32.totalorder %s87, %s90
    %p96 = scmp.eq.s32.totalorder %s9, 0
    %p97 = por %p95, %p96
    %p98 = scmp.ne.s32.totalorder %s87, %s90
    %p99 = scmp.eq.s32.totalorder %s14, 1
    %p100 = por %p98, %p99
    %p101 = scmp.ne.s32.totalorder %s90, %s91
    %p102 = scmp.eq.s32.totalorder %s14, 0
    %p103 = por %p101, %p102
    %p104 = scmp.ne.s32.totalorder %s90, %s91
    %p105 = scmp.eq.s32.totalorder %s15, 1
    %p106 = por %p104, %p105
    %p108 = scmp.ne.s32.totalorder %s91, %s107
    %p109 = scmp.eq.s32.totalorder %s15, 0
    %p110 = por %p108, %p109
    %p111 = scmp.le.s32.totalorder 1, %s9
    %p112 = scmp.lt.s32.totalorder %s9, 3
    %p113 = pnand %p111, %p112
    %p114 = pneg %p113
    // Predicated region
    $region9: #{deepspeed_test_m.1} parent=5 // pred_check
      _
    $region10: #{deepspeed_test_m.1} parent=5 // pred_check_branch
      %116 = sbr.rel (%p113) target = $region12
    $region11: #{deepspeed_test_m.1} parent=5 // pred_region
      %s117 = ssub.s32 %s9, 1
      // Predicated region
      $region13: #{deepspeed_test_m.1} parent=11 // pred_check
        %p118 = pneg %p56
      $region14: #{deepspeed_test_m.1} parent=11 // pred_check_branch
        %120 = sbr.rel (%p118) target = $region16
      $region15: #{deepspeed_test_m.1} parent=11 // pred_region
        _
      $region16: #{deepspeed_test_m.1} parent=11 // pred_fallthru
        _
      // Predicated region
      $region17: #{deepspeed_test_m.1} parent=11 // pred_check
        %p121 = pneg %p77
      $region18: #{deepspeed_test_m.1} parent=11 // pred_check_branch
        %123 = sbr.rel (%p121) target = $region20
      $region19: #{deepspeed_test_m.1} parent=11 // pred_region
        _
      $region20: #{deepspeed_test_m.1} parent=11 // pred_fallthru
        _
    $region12: #{deepspeed_test_m.1} parent=5 // pred_fallthru
      _
    %p124 = scmp.lt.s32.totalorder %s9, 2
    // Predicated region
    $region21: #{deepspeed_test_m.1} parent=5 // pred_check
      %p125 = pneg %p124
    $region22: #{deepspeed_test_m.1} parent=5 // pred_check_branch
      %127 = sbr.rel (%p125) target = $region24
    $region23: #{deepspeed_test_m.1} parent=5 // pred_region
      // Predicated region
      $region25: #{deepspeed_test_m.1} parent=23 // pred_check
        %p128 = pneg %p29
      $region26: #{deepspeed_test_m.1} parent=23 // pred_check_branch
        %130 = sbr.rel (%p128) target = $region28
      $region27: #{deepspeed_test_m.1} parent=23 // pred_region
        %p131 = scmp.lt.s32.totalorder %s9, 1
        %s132 = scalar_select %p131, %s9, 1
        %s133 = smul.addr %s132, 2
        %s134 = smul.addr %s133, 8
        %s135 = scalar_lea.vmem %s0, %s134
      $region28: #{deepspeed_test_m.1} parent=23 // pred_fallthru
        _
    $region24: #{deepspeed_test_m.1} parent=5 // pred_fallthru
      _
    %p136 = scmp.le.s32.totalorder 1, %s9
    %p137 = scmp.lt.s32.totalorder %s9, 3
    %p138 = pnand %p136, %p137
    %p139 = pneg %p138
    // Predicated region
    $region29: #{deepspeed_test_m.1} parent=5 // pred_check
      _
    $region30: #{deepspeed_test_m.1} parent=5 // pred_check_branch
      %141 = sbr.rel (%p138) target = $region32
    $region31: #{deepspeed_test_m.1} parent=5 // pred_region
      %s142 = ssub.s32 %s9, 1
      %p143 = scmp.lt.s32.totalorder %s14, 1
      %s144 = scalar_select %p143, %s14, 1
      %s145 = smul.addr %s144, 2
      %s146 = smul.addr %s145, 8
      %s147 = scalar_lea.vmem %s0, %s146
      %p148 = pneg %p35
      %p149 = pneg %p32
      %p150 = pneg %p56
      %p151 = pneg %p53
      %p152 = pneg %p77
      %p153 = pneg %p74
      %p154 = pneg %p103
      %p155 = pneg %p100
      %p156 = scmp.lt.s32.totalorder %s14, 1
      %s157 = scalar_select %p156, %s14, 1
      %s158 = smul.addr %s157, 8
      %s159 = scalar_lea.vmem %s3, %s158
      %p160 = scmp.lt.s32.totalorder %s14, 1
      %s161 = scalar_select %p160, %s14, 1
      %s162 = smul.addr %s161, 2
      %s163 = smul.addr %s162, 8
      %s164 = scalar_lea.vmem %s0, %s163
      %p165 = scmp.lt.s32.totalorder %s14, 1
      %s166 = scalar_select %p165, %s14, 1
      %s167 = smul.addr %s166, 8
      %s168 = scalar_lea.vmem %s3, %s167
      %v169 = vld [vmem:[%s164] sm:$0xff]
      %v170 = vld [vmem:[%s164 + $0x8] sm:$0xff]
      %v171 = vld [vmem:[%s1] sm:$0xff]
      %v172 = vld [vmem:[%s1 + $0x8] sm:$0xff]
      %v173 = vld [vmem:[%s1 + $0x10] sm:$0xff]
      %v174 = vld [vmem:[%s1 + $0x18] sm:$0xff]
      %v175 = vld [vmem:[%s1 + $0x20] sm:$0xff]
      %v176 = vld [vmem:[%s1 + $0x28] sm:$0xff]
      %v177 = vld [vmem:[%s1 + $0x30] sm:$0xff]
      %v178 = vld [vmem:[%s1 + $0x38] sm:$0xff]
      %v179 = vld [vmem:[%s1 + $0x40] sm:$0xff]
      %v180 = vld [vmem:[%s1 + $0x48] sm:$0xff]
      %v181 = vld [vmem:[%s1 + $0x50] sm:$0xff]
      %v182 = vld [vmem:[%s1 + $0x58] sm:$0xff]
      %v183 = vld [vmem:[%s1 + $0x60] sm:$0xff]
      %v184 = vld [vmem:[%s1 + $0x68] sm:$0xff]
      %v185 = vld [vmem:[%s1 + $0x70] sm:$0xff]
      %v186 = vld [vmem:[%s1 + $0x78] sm:$0xff]
      %v187 = vld [vmem:[%s1 + $0x80] sm:$0xff]
      %v188 = vld [vmem:[%s1 + $0x88] sm:$0xff]
      %v189 = vld [vmem:[%s1 + $0x90] sm:$0xff]
      %v190 = vld [vmem:[%s1 + $0x98] sm:$0xff]
      %v191 = vld [vmem:[%s1 + $0xa0] sm:$0xff]
      %v192 = vld [vmem:[%s1 + $0xa8] sm:$0xff]
      %v193 = vld [vmem:[%s1 + $0xb0] sm:$0xff]
      %v194 = vld [vmem:[%s1 + $0xb8] sm:$0xff]
      %v195 = vld [vmem:[%s1 + $0xc0] sm:$0xff]
      %v196 = vld [vmem:[%s1 + $0xc8] sm:$0xff]
      %v197 = vld [vmem:[%s1 + $0xd0] sm:$0xff]
      %v198 = vld [vmem:[%s1 + $0xd8] sm:$0xff]
      %v199 = vld [vmem:[%s1 + $0xe0] sm:$0xff]
      %v200 = vld [vmem:[%s1 + $0xe8] sm:$0xff]
      %v201 = vld [vmem:[%s1 + $0xf0] sm:$0xff]
      %v202 = vld [vmem:[%s1 + $0xf8] sm:$0xff]
      %v203 = vld [vmem:[%s2] sm:$0x1]
      %v205 = vlaneseq
      %v206 = vshrl.u32 %v205, 7
      %v207 = vsub.s32 0, %v206
      %v208 = vrot.slane %v203, %v207
      %210 = vmatprep.subr.mxu0 0.0
      %v211 = vand.u32 %v171, 4294901760
      %212 = vmatpush1.msra.mxu0 %v211
      %213 = vmatprep.subr.mxu0 0.0
      %v214 = vand.u32 %v172, 4294901760
      %215 = vmatpush1.msra.mxu0 %v214
      %216 = vmatprep.subr.mxu0 0.0
      %v217 = vand.u32 %v173, 4294901760
      %218 = vmatpush1.msra.mxu0 %v217
      %219 = vmatprep.subr.mxu0 0.0
      %v220 = vand.u32 %v174, 4294901760
      %221 = vmatpush1.msra.mxu0 %v220
      %222 = vmatprep.subr.mxu0 0.0
      %v223 = vand.u32 %v175, 4294901760
      %224 = vmatpush1.msra.mxu0 %v223
      %225 = vmatprep.subr.mxu0 0.0
      %v226 = vand.u32 %v176, 4294901760
      %227 = vmatpush1.msra.mxu0 %v226
      %228 = vmatprep.subr.mxu0 0.0
      %v229 = vand.u32 %v177, 4294901760
      %230 = vmatpush1.msra.mxu0 %v229
      %231 = vmatprep.subr.mxu0 0.0
      %v232 = vand.u32 %v178, 4294901760
      %233 = vmatpush1.msra.mxu0 %v232
      %234 = vmatprep.subr.mxu0 0.0
      %v235 = vand.u32 %v179, 4294901760
      %236 = vmatpush1.msra.mxu0 %v235
      %237 = vmatprep.subr.mxu0 0.0
      %v238 = vand.u32 %v180, 4294901760
      %239 = vmatpush1.msra.mxu0 %v238
      %240 = vmatprep.subr.mxu0 0.0
      %v241 = vand.u32 %v181, 4294901760
      %242 = vmatpush1.msra.mxu0 %v241
      %243 = vmatprep.subr.mxu0 0.0
      %v244 = vand.u32 %v182, 4294901760
      %245 = vmatpush1.msra.mxu0 %v244
      %246 = vmatprep.subr.mxu0 0.0
      %v247 = vand.u32 %v183, 4294901760
      %248 = vmatpush1.msra.mxu0 %v247
      %249 = vmatprep.subr.mxu0 0.0
      %v250 = vand.u32 %v184, 4294901760
      %251 = vmatpush1.msra.mxu0 %v250
      %252 = vmatprep.subr.mxu0 0.0
      %v253 = vand.u32 %v185, 4294901760
      %254 = vmatpush1.msra.mxu0 %v253
      %255 = vmatprep.subr.mxu0 0.0
      %v256 = vand.u32 %v186, 4294901760
      %257 = vmatpush1.msra.mxu0 %v256
      %258 = vmatprep.subr.mxu0 0.0
      %v259 = vand.u32 %v187, 4294901760
      %260 = vmatpush1.msra.mxu0 %v259
      %261 = vmatprep.subr.mxu0 0.0
      %v262 = vand.u32 %v188, 4294901760
      %263 = vmatpush1.msra.mxu0 %v262
      %264 = vmatprep.subr.mxu0 0.0
      %v265 = vand.u32 %v189, 4294901760
      %266 = vmatpush1.msra.mxu0 %v265
      %267 = vmatprep.subr.mxu0 0.0
      %v268 = vand.u32 %v190, 4294901760
      %269 = vmatpush1.msra.mxu0 %v268
      %270 = vmatprep.subr.mxu0 0.0
      %v271 = vand.u32 %v191, 4294901760
      %272 = vmatpush1.msra.mxu0 %v271
      %273 = vmatprep.subr.mxu0 0.0
      %v274 = vand.u32 %v192, 4294901760
      %275 = vmatpush1.msra.mxu0 %v274
      %276 = vmatprep.subr.mxu0 0.0
      %v277 = vand.u32 %v193, 4294901760
      %278 = vmatpush1.msra.mxu0 %v277
      %279 = vmatprep.subr.mxu0 0.0
      %v280 = vand.u32 %v194, 4294901760
      %281 = vmatpush1.msra.mxu0 %v280
      %282 = vmatprep.subr.mxu0 0.0
      %v283 = vand.u32 %v195, 4294901760
      %284 = vmatpush1.msra.mxu0 %v283
      %285 = vmatprep.subr.mxu0 0.0
      %v286 = vand.u32 %v196, 4294901760
      %287 = vmatpush1.msra.mxu0 %v286
      %288 = vmatprep.subr.mxu0 0.0
      %v289 = vand.u32 %v197, 4294901760
      %290 = vmatpush1.msra.mxu0 %v289
      %291 = vmatprep.subr.mxu0 0.0
      %v292 = vand.u32 %v198, 4294901760
      %293 = vmatpush1.msra.mxu0 %v292
      %294 = vmatprep.subr.mxu0 0.0
      %v295 = vand.u32 %v199, 4294901760
      %296 = vmatpush1.msra.mxu0 %v295
      %297 = vmatprep.subr.mxu0 0.0
      %v298 = vand.u32 %v200, 4294901760
      %299 = vmatpush1.msra.mxu0 %v298
      %300 = vmatprep.subr.mxu0 0.0
      %v301 = vand.u32 %v201, 4294901760
      %302 = vmatpush1.msra.mxu0 %v301
      %303 = vmatprep.subr.mxu0 0.0
      %v304 = vand.u32 %v202, 4294901760
      %305 = vmatpush1.msra.mxu0 %v304
      %v306 = vand.u32 %v170, 4294901760
      %v307 = vsub.f32 %v170, %v306
      %v308 = vand.u32 %v307, 4294901760
      %v309 = vsub.f32 %v307, %v308
      %v310 = vand.u32 %v309, 4294901760
      %311 = vmatprep.mubr.f32.mxu0 %v310
      %v312 = vand.u32 %v169, 4294901760
      %v313 = vsub.f32 %v169, %v312
      %v314 = vand.u32 %v313, 4294901760
      %v315 = vsub.f32 %v313, %v314
      %v316 = vand.u32 %v315, 4294901760
      %317 = vmatmul.mubr.f32.gmra.mrb[0].mxu0 %v316
      %v318 = vpop.f32.mrb[0].mxu0
      %v319 = vadd.f32 %v208, %v318
      %v320 = vpop.f32.mrb[0].mxu0
      %321 = vdwg.mxu0
      %322 = vmatprep.subr.mxu0 0.0
      %v323 = vand.u32 %v171, 4294901760
      %v324 = vsub.f32 %v171, %v323
      %v325 = vand.u32 %v324, 4294901760
      %v326 = vsub.f32 %v324, %v325
      %v327 = vand.u32 %v326, 4294901760
      %328 = vmatpush1.msra.mxu0 %v327
      %329 = vmatprep.subr.mxu0 0.0
      %v330 = vand.u32 %v172, 4294901760
      %v331 = vsub.f32 %v172, %v330
      %v332 = vand.u32 %v331, 4294901760
      %v333 = vsub.f32 %v331, %v332
      %v334 = vand.u32 %v333, 4294901760
      %335 = vmatpush1.msra.mxu0 %v334
      %336 = vmatprep.subr.mxu0 0.0
      %v337 = vand.u32 %v173, 4294901760
      %v338 = vsub.f32 %v173, %v337
      %v339 = vand.u32 %v338, 4294901760
      %v340 = vsub.f32 %v338, %v339
      %v341 = vand.u32 %v340, 4294901760
      %342 = vmatpush1.msra.mxu0 %v341
      %343 = vmatprep.subr.mxu0 0.0
      %v344 = vand.u32 %v174, 4294901760
      %v345 = vsub.f32 %v174, %v344
      %v346 = vand.u32 %v345, 4294901760
      %v347 = vsub.f32 %v345, %v346
      %v348 = vand.u32 %v347, 4294901760
      %349 = vmatpush1.msra.mxu0 %v348
      %350 = vmatprep.subr.mxu0 0.0
      %v351 = vand.u32 %v175, 4294901760
      %v352 = vsub.f32 %v175, %v351
      %v353 = vand.u32 %v352, 4294901760
      %v354 = vsub.f32 %v352, %v353
      %v355 = vand.u32 %v354, 4294901760
      %356 = vmatpush1.msra.mxu0 %v355
      %357 = vmatprep.subr.mxu0 0.0
      %v358 = vand.u32 %v176, 4294901760
      %v359 = vsub.f32 %v176, %v358
      %v360 = vand.u32 %v359, 4294901760
      %v361 = vsub.f32 %v359, %v360
      %v362 = vand.u32 %v361, 4294901760
      %363 = vmatpush1.msra.mxu0 %v362
      %364 = vmatprep.subr.mxu0 0.0
      %v365 = vand.u32 %v177, 4294901760
      %v366 = vsub.f32 %v177, %v365
      %v367 = vand.u32 %v366, 4294901760
      %v368 = vsub.f32 %v366, %v367
      %v369 = vand.u32 %v368, 4294901760
      %370 = vmatpush1.msra.mxu0 %v369
      %371 = vmatprep.subr.mxu0 0.0
      %v372 = vand.u32 %v178, 4294901760
      %v373 = vsub.f32 %v178, %v372
      %v374 = vand.u32 %v373, 4294901760
      %v375 = vsub.f32 %v373, %v374
      %v376 = vand.u32 %v375, 4294901760
      %377 = vmatpush1.msra.mxu0 %v376
      %378 = vmatprep.subr.mxu0 0.0
      %v379 = vand.u32 %v179, 4294901760
      %v380 = vsub.f32 %v179, %v379
      %v381 = vand.u32 %v380, 4294901760
      %v382 = vsub.f32 %v380, %v381
      %v383 = vand.u32 %v382, 4294901760
      %384 = vmatpush1.msra.mxu0 %v383
      %385 = vmatprep.subr.mxu0 0.0
      %v386 = vand.u32 %v180, 4294901760
      %v387 = vsub.f32 %v180, %v386
      %v388 = vand.u32 %v387, 4294901760
      %v389 = vsub.f32 %v387, %v388
      %v390 = vand.u32 %v389, 4294901760
      %391 = vmatpush1.msra.mxu0 %v390
      %392 = vmatprep.subr.mxu0 0.0
      %v393 = vand.u32 %v181, 4294901760
      %v394 = vsub.f32 %v181, %v393
      %v395 = vand.u32 %v394, 4294901760
      %v396 = vsub.f32 %v394, %v395
      %v397 = vand.u32 %v396, 4294901760
      %398 = vmatpush1.msra.mxu0 %v397
      %399 = vmatprep.subr.mxu0 0.0
      %v400 = vand.u32 %v182, 4294901760
      %v401 = vsub.f32 %v182, %v400
      %v402 = vand.u32 %v401, 4294901760
      %v403 = vsub.f32 %v401, %v402
      %v404 = vand.u32 %v403, 4294901760
      %405 = vmatpush1.msra.mxu0 %v404
      %406 = vmatprep.subr.mxu0 0.0
      %v407 = vand.u32 %v183, 4294901760
      %v408 = vsub.f32 %v183, %v407
      %v409 = vand.u32 %v408, 4294901760
      %v410 = vsub.f32 %v408, %v409
      %v411 = vand.u32 %v410, 4294901760
      %412 = vmatpush1.msra.mxu0 %v411
      %413 = vmatprep.subr.mxu0 0.0
      %v414 = vand.u32 %v184, 4294901760
      %v415 = vsub.f32 %v184, %v414
      %v416 = vand.u32 %v415, 4294901760
      %v417 = vsub.f32 %v415, %v416
      %v418 = vand.u32 %v417, 4294901760
      %419 = vmatpush1.msra.mxu0 %v418
      %420 = vmatprep.subr.mxu0 0.0
      %v421 = vand.u32 %v185, 4294901760
      %v422 = vsub.f32 %v185, %v421
      %v423 = vand.u32 %v422, 4294901760
      %v424 = vsub.f32 %v422, %v423
      %v425 = vand.u32 %v424, 4294901760
      %426 = vmatpush1.msra.mxu0 %v425
      %427 = vmatprep.subr.mxu0 0.0
      %v428 = vand.u32 %v186, 4294901760
      %v429 = vsub.f32 %v186, %v428
      %v430 = vand.u32 %v429, 4294901760
      %v431 = vsub.f32 %v429, %v430
      %v432 = vand.u32 %v431, 4294901760
      %433 = vmatpush1.msra.mxu0 %v432
      %434 = vmatprep.subr.mxu0 0.0
      %v435 = vand.u32 %v187, 4294901760
      %v436 = vsub.f32 %v187, %v435
      %v437 = vand.u32 %v436, 4294901760
      %v438 = vsub.f32 %v436, %v437
      %v439 = vand.u32 %v438, 4294901760
      %440 = vmatpush1.msra.mxu0 %v439
      %441 = vmatprep.subr.mxu0 0.0
      %v442 = vand.u32 %v188, 4294901760
      %v443 = vsub.f32 %v188, %v442
      %v444 = vand.u32 %v443, 4294901760
      %v445 = vsub.f32 %v443, %v444
      %v446 = vand.u32 %v445, 4294901760
      %447 = vmatpush1.msra.mxu0 %v446
      %448 = vmatprep.subr.mxu0 0.0
      %v449 = vand.u32 %v189, 4294901760
      %v450 = vsub.f32 %v189, %v449
      %v451 = vand.u32 %v450, 4294901760
      %v452 = vsub.f32 %v450, %v451
      %v453 = vand.u32 %v452, 4294901760
      %454 = vmatpush1.msra.mxu0 %v453
      %455 = vmatprep.subr.mxu0 0.0
      %v456 = vand.u32 %v190, 4294901760
      %v457 = vsub.f32 %v190, %v456
      %v458 = vand.u32 %v457, 4294901760
      %v459 = vsub.f32 %v457, %v458
      %v460 = vand.u32 %v459, 4294901760
      %461 = vmatpush1.msra.mxu0 %v460
      %462 = vmatprep.subr.mxu0 0.0
      %v463 = vand.u32 %v191, 4294901760
      %v464 = vsub.f32 %v191, %v463
      %v465 = vand.u32 %v464, 4294901760
      %v466 = vsub.f32 %v464, %v465
      %v467 = vand.u32 %v466, 4294901760
      %468 = vmatpush1.msra.mxu0 %v467
      %469 = vmatprep.subr.mxu0 0.0
      %v470 = vand.u32 %v192, 4294901760
      %v471 = vsub.f32 %v192, %v470
      %v472 = vand.u32 %v471, 4294901760
      %v473 = vsub.f32 %v471, %v472
      %v474 = vand.u32 %v473, 4294901760
      %475 = vmatpush1.msra.mxu0 %v474
      %476 = vmatprep.subr.mxu0 0.0
      %v477 = vand.u32 %v193, 4294901760
      %v478 = vsub.f32 %v193, %v477
      %v479 = vand.u32 %v478, 4294901760
      %v480 = vsub.f32 %v478, %v479
      %v481 = vand.u32 %v480, 4294901760
      %482 = vmatpush1.msra.mxu0 %v481
      %483 = vmatprep.subr.mxu0 0.0
      %v484 = vand.u32 %v194, 4294901760
      %v485 = vsub.f32 %v194, %v484
      %v486 = vand.u32 %v485, 4294901760
      %v487 = vsub.f32 %v485, %v486
      %v488 = vand.u32 %v487, 4294901760
      %489 = vmatpush1.msra.mxu0 %v488
      %490 = vmatprep.subr.mxu0 0.0
      %v491 = vand.u32 %v195, 4294901760
      %v492 = vsub.f32 %v195, %v491
      %v493 = vand.u32 %v492, 4294901760
      %v494 = vsub.f32 %v492, %v493
      %v495 = vand.u32 %v494, 4294901760
      %496 = vmatpush1.msra.mxu0 %v495
      %497 = vmatprep.subr.mxu0 0.0
      %v498 = vand.u32 %v196, 4294901760
      %v499 = vsub.f32 %v196, %v498
      %v500 = vand.u32 %v499, 4294901760
      %v501 = vsub.f32 %v499, %v500
      %v502 = vand.u32 %v501, 4294901760
      %503 = vmatpush1.msra.mxu0 %v502
      %504 = vmatprep.subr.mxu0 0.0
      %v505 = vand.u32 %v197, 4294901760
      %v506 = vsub.f32 %v197, %v505
      %v507 = vand.u32 %v506, 4294901760
      %v508 = vsub.f32 %v506, %v507
      %v509 = vand.u32 %v508, 4294901760
      %510 = vmatpush1.msra.mxu0 %v509
      %511 = vmatprep.subr.mxu0 0.0
      %v512 = vand.u32 %v198, 4294901760
      %v513 = vsub.f32 %v198, %v512
      %v514 = vand.u32 %v513, 4294901760
      %v515 = vsub.f32 %v513, %v514
      %v516 = vand.u32 %v515, 4294901760
      %517 = vmatpush1.msra.mxu0 %v516
      %518 = vmatprep.subr.mxu0 0.0
      %v519 = vand.u32 %v199, 4294901760
      %v520 = vsub.f32 %v199, %v519
      %v521 = vand.u32 %v520, 4294901760
      %v522 = vsub.f32 %v520, %v521
      %v523 = vand.u32 %v522, 4294901760
      %524 = vmatpush1.msra.mxu0 %v523
      %525 = vmatprep.subr.mxu0 0.0
      %v526 = vand.u32 %v200, 4294901760
      %v527 = vsub.f32 %v200, %v526
      %v528 = vand.u32 %v527, 4294901760
      %v529 = vsub.f32 %v527, %v528
      %v530 = vand.u32 %v529, 4294901760
      %531 = vmatpush1.msra.mxu0 %v530
      %532 = vmatprep.subr.mxu0 0.0
      %v533 = vand.u32 %v201, 4294901760
      %v534 = vsub.f32 %v201, %v533
      %v535 = vand.u32 %v534, 4294901760
      %v536 = vsub.f32 %v534, %v535
      %v537 = vand.u32 %v536, 4294901760
      %538 = vmatpush1.msra.mxu0 %v537
      %539 = vmatprep.subr.mxu0 0.0
      %v540 = vand.u32 %v202, 4294901760
      %v541 = vsub.f32 %v202, %v540
      %v542 = vand.u32 %v541, 4294901760
      %v543 = vsub.f32 %v541, %v542
      %v544 = vand.u32 %v543, 4294901760
      %545 = vmatpush1.msra.mxu0 %v544
      %v546 = vand.u32 %v170, 4294901760
      %547 = vmatprep.mubr.f32.mxu0 %v546
      %v548 = vand.u32 %v169, 4294901760
      %549 = vmatmul.mubr.f32.gmra.mrb[0].mxu0 %v548
      %v550 = vpop.f32.mrb[0].mxu0
      %v551 = vadd.f32 %v319, %v550
      %v552 = vpop.f32.mrb[0].mxu0
      %553 = vdwg.mxu0
      %554 = vmatprep.subr.mxu0 0.0
      %v555 = vand.u32 %v171, 4294901760
      %v556 = vsub.f32 %v171, %v555
      %557 = vmatpush1.msra.mxu0 %v556
      %558 = vmatprep.subr.mxu0 0.0
      %v559 = vand.u32 %v172, 4294901760
      %v560 = vsub.f32 %v172, %v559
      %561 = vmatpush1.msra.mxu0 %v560
      %562 = vmatprep.subr.mxu0 0.0
      %v563 = vand.u32 %v173, 4294901760
      %v564 = vsub.f32 %v173, %v563
      %565 = vmatpush1.msra.mxu0 %v564
      %566 = vmatprep.subr.mxu0 0.0
      %v567 = vand.u32 %v174, 4294901760
      %v568 = vsub.f32 %v174, %v567
      %569 = vmatpush1.msra.mxu0 %v568
      %570 = vmatprep.subr.mxu0 0.0
      %v571 = vand.u32 %v175, 4294901760
      %v572 = vsub.f32 %v175, %v571
      %573 = vmatpush1.msra.mxu0 %v572
      %574 = vmatprep.subr.mxu0 0.0
      %v575 = vand.u32 %v176, 4294901760
      %v576 = vsub.f32 %v176, %v575
      %577 = vmatpush1.msra.mxu0 %v576
      %578 = vmatprep.subr.mxu0 0.0
      %v579 = vand.u32 %v177, 4294901760
      %v580 = vsub.f32 %v177, %v579
      %581 = vmatpush1.msra.mxu0 %v580
      %582 = vmatprep.subr.mxu0 0.0
      %v583 = vand.u32 %v178, 4294901760
      %v584 = vsub.f32 %v178, %v583
      %585 = vmatpush1.msra.mxu0 %v584
      %586 = vmatprep.subr.mxu0 0.0
      %v587 = vand.u32 %v179, 4294901760
      %v588 = vsub.f32 %v179, %v587
      %589 = vmatpush1.msra.mxu0 %v588
      %590 = vmatprep.subr.mxu0 0.0
      %v591 = vand.u32 %v180, 4294901760
      %v592 = vsub.f32 %v180, %v591
      %593 = vmatpush1.msra.mxu0 %v592
      %594 = vmatprep.subr.mxu0 0.0
      %v595 = vand.u32 %v181, 4294901760
      %v596 = vsub.f32 %v181, %v595
      %597 = vmatpush1.msra.mxu0 %v596
      %598 = vmatprep.subr.mxu0 0.0
      %v599 = vand.u32 %v182, 4294901760
      %v600 = vsub.f32 %v182, %v599
      %601 = vmatpush1.msra.mxu0 %v600
      %602 = vmatprep.subr.mxu0 0.0
      %v603 = vand.u32 %v183, 4294901760
      %v604 = vsub.f32 %v183, %v603
      %605 = vmatpush1.msra.mxu0 %v604
      %606 = vmatprep.subr.mxu0 0.0
      %v607 = vand.u32 %v184, 4294901760
      %v608 = vsub.f32 %v184, %v607
      %609 = vmatpush1.msra.mxu0 %v608
      %610 = vmatprep.subr.mxu0 0.0
      %v611 = vand.u32 %v185, 4294901760
      %v612 = vsub.f32 %v185, %v611
      %613 = vmatpush1.msra.mxu0 %v612
      %614 = vmatprep.subr.mxu0 0.0
      %v615 = vand.u32 %v186, 4294901760
      %v616 = vsub.f32 %v186, %v615
      %617 = vmatpush1.msra.mxu0 %v616
      %618 = vmatprep.subr.mxu0 0.0
      %v619 = vand.u32 %v187, 4294901760
      %v620 = vsub.f32 %v187, %v619
      %621 = vmatpush1.msra.mxu0 %v620
      %622 = vmatprep.subr.mxu0 0.0
      %v623 = vand.u32 %v188, 4294901760
      %v624 = vsub.f32 %v188, %v623
      %625 = vmatpush1.msra.mxu0 %v624
      %626 = vmatprep.subr.mxu0 0.0
      %v627 = vand.u32 %v189, 4294901760
      %v628 = vsub.f32 %v189, %v627
      %629 = vmatpush1.msra.mxu0 %v628
      %630 = vmatprep.subr.mxu0 0.0
      %v631 = vand.u32 %v190, 4294901760
      %v632 = vsub.f32 %v190, %v631
      %633 = vmatpush1.msra.mxu0 %v632
      %634 = vmatprep.subr.mxu0 0.0
      %v635 = vand.u32 %v191, 4294901760
      %v636 = vsub.f32 %v191, %v635
      %637 = vmatpush1.msra.mxu0 %v636
      %638 = vmatprep.subr.mxu0 0.0
      %v639 = vand.u32 %v192, 4294901760
      %v640 = vsub.f32 %v192, %v639
      %641 = vmatpush1.msra.mxu0 %v640
      %642 = vmatprep.subr.mxu0 0.0
      %v643 = vand.u32 %v193, 4294901760
      %v644 = vsub.f32 %v193, %v643
      %645 = vmatpush1.msra.mxu0 %v644
      %646 = vmatprep.subr.mxu0 0.0
      %v647 = vand.u32 %v194, 4294901760
      %v648 = vsub.f32 %v194, %v647
      %649 = vmatpush1.msra.mxu0 %v648
      %650 = vmatprep.subr.mxu0 0.0
      %v651 = vand.u32 %v195, 4294901760
      %v652 = vsub.f32 %v195, %v651
      %653 = vmatpush1.msra.mxu0 %v652
      %654 = vmatprep.subr.mxu0 0.0
      %v655 = vand.u32 %v196, 4294901760
      %v656 = vsub.f32 %v196, %v655
      %657 = vmatpush1.msra.mxu0 %v656
      %658 = vmatprep.subr.mxu0 0.0
      %v659 = vand.u32 %v197, 4294901760
      %v660 = vsub.f32 %v197, %v659
      %661 = vmatpush1.msra.mxu0 %v660
      %662 = vmatprep.subr.mxu0 0.0
      %v663 = vand.u32 %v198, 4294901760
      %v664 = vsub.f32 %v198, %v663
      %665 = vmatpush1.msra.mxu0 %v664
      %666 = vmatprep.subr.mxu0 0.0
      %v667 = vand.u32 %v199, 4294901760
      %v668 = vsub.f32 %v199, %v667
      %669 = vmatpush1.msra.mxu0 %v668
      %670 = vmatprep.subr.mxu0 0.0
      %v671 = vand.u32 %v200, 4294901760
      %v672 = vsub.f32 %v200, %v671
      %673 = vmatpush1.msra.mxu0 %v672
      %674 = vmatprep.subr.mxu0 0.0
      %v675 = vand.u32 %v201, 4294901760
      %v676 = vsub.f32 %v201, %v675
      %677 = vmatpush1.msra.mxu0 %v676
      %678 = vmatprep.subr.mxu0 0.0
      %v679 = vand.u32 %v202, 4294901760
      %v680 = vsub.f32 %v202, %v679
      %681 = vmatpush1.msra.mxu0 %v680
      %v682 = vand.u32 %v170, 4294901760
      %v683 = vsub.f32 %v170, %v682
      %684 = vmatprep.mubr.f32.mxu0 %v683
      %v685 = vand.u32 %v169, 4294901760
      %v686 = vsub.f32 %v169, %v685
      %687 = vmatmul.mubr.f32.gmra.mrb[0].mxu0 %v686
      %v688 = vpop.f32.mrb[0].mxu0
      %v689 = vadd.f32 %v551, %v688
      %v690 = vpop.f32.mrb[0].mxu0
      %691 = vdwg.mxu0
      %692 = vmatprep.subr.mxu0 0.0
      %v693 = vand.u32 %v171, 4294901760
      %694 = vmatpush1.msra.mxu0 %v693
      %695 = vmatprep.subr.mxu0 0.0
      %v696 = vand.u32 %v172, 4294901760
      %697 = vmatpush1.msra.mxu0 %v696
      %698 = vmatprep.subr.mxu0 0.0
      %v699 = vand.u32 %v173, 4294901760
      %700 = vmatpush1.msra.mxu0 %v699
      %701 = vmatprep.subr.mxu0 0.0
      %v702 = vand.u32 %v174, 4294901760
      %703 = vmatpush1.msra.mxu0 %v702
      %704 = vmatprep.subr.mxu0 0.0
      %v705 = vand.u32 %v175, 4294901760
      %706 = vmatpush1.msra.mxu0 %v705
      %707 = vmatprep.subr.mxu0 0.0
      %v708 = vand.u32 %v176, 4294901760
      %709 = vmatpush1.msra.mxu0 %v708
      %710 = vmatprep.subr.mxu0 0.0
      %v711 = vand.u32 %v177, 4294901760
      %712 = vmatpush1.msra.mxu0 %v711
      %713 = vmatprep.subr.mxu0 0.0
      %v714 = vand.u32 %v178, 4294901760
      %715 = vmatpush1.msra.mxu0 %v714
      %716 = vmatprep.subr.mxu0 0.0
      %v717 = vand.u32 %v179, 4294901760
      %718 = vmatpush1.msra.mxu0 %v717
      %719 = vmatprep.subr.mxu0 0.0
      %v720 = vand.u32 %v180, 4294901760
      %721 = vmatpush1.msra.mxu0 %v720
      %722 = vmatprep.subr.mxu0 0.0
      %v723 = vand.u32 %v181, 4294901760
      %724 = vmatpush1.msra.mxu0 %v723
      %725 = vmatprep.subr.mxu0 0.0
      %v726 = vand.u32 %v182, 4294901760
      %727 = vmatpush1.msra.mxu0 %v726
      %728 = vmatprep.subr.mxu0 0.0
      %v729 = vand.u32 %v183, 4294901760
      %730 = vmatpush1.msra.mxu0 %v729
      %731 = vmatprep.subr.mxu0 0.0
      %v732 = vand.u32 %v184, 4294901760
      %733 = vmatpush1.msra.mxu0 %v732
      %734 = vmatprep.subr.mxu0 0.0
      %v735 = vand.u32 %v185, 4294901760
      %736 = vmatpush1.msra.mxu0 %v735
      %737 = vmatprep.subr.mxu0 0.0
      %v738 = vand.u32 %v186, 4294901760
      %739 = vmatpush1.msra.mxu0 %v738
      %740 = vmatprep.subr.mxu0 0.0
      %v741 = vand.u32 %v187, 4294901760
      %742 = vmatpush1.msra.mxu0 %v741
      %743 = vmatprep.subr.mxu0 0.0
      %v744 = vand.u32 %v188, 4294901760
      %745 = vmatpush1.msra.mxu0 %v744
      %746 = vmatprep.subr.mxu0 0.0
      %v747 = vand.u32 %v189, 4294901760
      %748 = vmatpush1.msra.mxu0 %v747
      %749 = vmatprep.subr.mxu0 0.0
      %v750 = vand.u32 %v190, 4294901760
      %751 = vmatpush1.msra.mxu0 %v750
      %752 = vmatprep.subr.mxu0 0.0
      %v753 = vand.u32 %v191, 4294901760
      %754 = vmatpush1.msra.mxu0 %v753
      %755 = vmatprep.subr.mxu0 0.0
      %v756 = vand.u32 %v192, 4294901760
      %757 = vmatpush1.msra.mxu0 %v756
      %758 = vmatprep.subr.mxu0 0.0
      %v759 = vand.u32 %v193, 4294901760
      %760 = vmatpush1.msra.mxu0 %v759
      %761 = vmatprep.subr.mxu0 0.0
      %v762 = vand.u32 %v194, 4294901760
      %763 = vmatpush1.msra.mxu0 %v762
      %764 = vmatprep.subr.mxu0 0.0
      %v765 = vand.u32 %v195, 4294901760
      %766 = vmatpush1.msra.mxu0 %v765
      %767 = vmatprep.subr.mxu0 0.0
      %v768 = vand.u32 %v196, 4294901760
      %769 = vmatpush1.msra.mxu0 %v768
      %770 = vmatprep.subr.mxu0 0.0
      %v771 = vand.u32 %v197, 4294901760
      %772 = vmatpush1.msra.mxu0 %v771
      %773 = vmatprep.subr.mxu0 0.0
      %v774 = vand.u32 %v198, 4294901760
      %775 = vmatpush1.msra.mxu0 %v774
      %776 = vmatprep.subr.mxu0 0.0
      %v777 = vand.u32 %v199, 4294901760
      %778 = vmatpush1.msra.mxu0 %v777
      %779 = vmatprep.subr.mxu0 0.0
      %v780 = vand.u32 %v200, 4294901760
      %781 = vmatpush1.msra.mxu0 %v780
      %782 = vmatprep.subr.mxu0 0.0
      %v783 = vand.u32 %v201, 4294901760
      %784 = vmatpush1.msra.mxu0 %v783
      %785 = vmatprep.subr.mxu0 0.0
      %v786 = vand.u32 %v202, 4294901760
      %787 = vmatpush1.msra.mxu0 %v786
      %v788 = vand.u32 %v170, 4294901760
      %v789 = vsub.f32 %v170, %v788
      %v790 = vand.u32 %v789, 4294901760
      %791 = vmatprep.mubr.f32.mxu0 %v790
      %v792 = vand.u32 %v169, 4294901760
      %v793 = vsub.f32 %v169, %v792
      %v794 = vand.u32 %v793, 4294901760
      %795 = vmatmul.mubr.f32.gmra.mrb[0].mxu0 %v794
      %v796 = vpop.f32.mrb[0].mxu0
      %v797 = vadd.f32 %v689, %v796
      %v798 = vpop.f32.mrb[0].mxu0
      %799 = vdwg.mxu0
      %800 = vmatprep.subr.mxu0 0.0
      %v801 = vand.u32 %v171, 4294901760
      %v802 = vsub.f32 %v171, %v801
      %v803 = vand.u32 %v802, 4294901760
      %804 = vmatpush1.msra.mxu0 %v803
      %805 = vmatprep.subr.mxu0 0.0
      %v806 = vand.u32 %v172, 4294901760
      %v807 = vsub.f32 %v172, %v806
      %v808 = vand.u32 %v807, 4294901760
      %809 = vmatpush1.msra.mxu0 %v808
      %810 = vmatprep.subr.mxu0 0.0
      %v811 = vand.u32 %v173, 4294901760
      %v812 = vsub.f32 %v173, %v811
      %v813 = vand.u32 %v812, 4294901760
      %814 = vmatpush1.msra.mxu0 %v813
      %815 = vmatprep.subr.mxu0 0.0
      %v816 = vand.u32 %v174, 4294901760
      %v817 = vsub.f32 %v174, %v816
      %v818 = vand.u32 %v817, 4294901760
      %819 = vmatpush1.msra.mxu0 %v818
      %820 = vmatprep.subr.mxu0 0.0
      %v821 = vand.u32 %v175, 4294901760
      %v822 = vsub.f32 %v175, %v821
      %v823 = vand.u32 %v822, 4294901760
      %824 = vmatpush1.msra.mxu0 %v823
      %825 = vmatprep.subr.mxu0 0.0
      %v826 = vand.u32 %v176, 4294901760
      %v827 = vsub.f32 %v176, %v826
      %v828 = vand.u32 %v827, 4294901760
      %829 = vmatpush1.msra.mxu0 %v828
      %830 = vmatprep.subr.mxu0 0.0
      %v831 = vand.u32 %v177, 4294901760
      %v832 = vsub.f32 %v177, %v831
      %v833 = vand.u32 %v832, 4294901760
      %834 = vmatpush1.msra.mxu0 %v833
      %835 = vmatprep.subr.mxu0 0.0
      %v836 = vand.u32 %v178, 4294901760
      %v837 = vsub.f32 %v178, %v836
      %v838 = vand.u32 %v837, 4294901760
      %839 = vmatpush1.msra.mxu0 %v838
      %840 = vmatprep.subr.mxu0 0.0
      %v841 = vand.u32 %v179, 4294901760
      %v842 = vsub.f32 %v179, %v841
      %v843 = vand.u32 %v842, 4294901760
      %844 = vmatpush1.msra.mxu0 %v843
      %845 = vmatprep.subr.mxu0 0.0
      %v846 = vand.u32 %v180, 4294901760
      %v847 = vsub.f32 %v180, %v846
      %v848 = vand.u32 %v847, 4294901760
      %849 = vmatpush1.msra.mxu0 %v848
      %850 = vmatprep.subr.mxu0 0.0
      %v851 = vand.u32 %v181, 4294901760
      %v852 = vsub.f32 %v181, %v851
      %v853 = vand.u32 %v852, 4294901760
      %854 = vmatpush1.msra.mxu0 %v853
      %855 = vmatprep.subr.mxu0 0.0
      %v856 = vand.u32 %v182, 4294901760
      %v857 = vsub.f32 %v182, %v856
      %v858 = vand.u32 %v857, 4294901760
      %859 = vmatpush1.msra.mxu0 %v858
      %860 = vmatprep.subr.mxu0 0.0
      %v861 = vand.u32 %v183, 4294901760
      %v862 = vsub.f32 %v183, %v861
      %v863 = vand.u32 %v862, 4294901760
      %864 = vmatpush1.msra.mxu0 %v863
      %865 = vmatprep.subr.mxu0 0.0
      %v866 = vand.u32 %v184, 4294901760
      %v867 = vsub.f32 %v184, %v866
      %v868 = vand.u32 %v867, 4294901760
      %869 = vmatpush1.msra.mxu0 %v868
      %870 = vmatprep.subr.mxu0 0.0
      %v871 = vand.u32 %v185, 4294901760
      %v872 = vsub.f32 %v185, %v871
      %v873 = vand.u32 %v872, 4294901760
      %874 = vmatpush1.msra.mxu0 %v873
      %875 = vmatprep.subr.mxu0 0.0
      %v876 = vand.u32 %v186, 4294901760
      %v877 = vsub.f32 %v186, %v876
      %v878 = vand.u32 %v877, 4294901760
      %879 = vmatpush1.msra.mxu0 %v878
      %880 = vmatprep.subr.mxu0 0.0
      %v881 = vand.u32 %v187, 4294901760
      %v882 = vsub.f32 %v187, %v881
      %v883 = vand.u32 %v882, 4294901760
      %884 = vmatpush1.msra.mxu0 %v883
      %885 = vmatprep.subr.mxu0 0.0
      %v886 = vand.u32 %v188, 4294901760
      %v887 = vsub.f32 %v188, %v886
      %v888 = vand.u32 %v887, 4294901760
      %889 = vmatpush1.msra.mxu0 %v888
      %890 = vmatprep.subr.mxu0 0.0
      %v891 = vand.u32 %v189, 4294901760
      %v892 = vsub.f32 %v189, %v891
      %v893 = vand.u32 %v892, 4294901760
      %894 = vmatpush1.msra.mxu0 %v893
      %895 = vmatprep.subr.mxu0 0.0
      %v896 = vand.u32 %v190, 4294901760
      %v897 = vsub.f32 %v190, %v896
      %v898 = vand.u32 %v897, 4294901760
      %899 = vmatpush1.msra.mxu0 %v898
      %900 = vmatprep.subr.mxu0 0.0
      %v901 = vand.u32 %v191, 4294901760
      %v902 = vsub.f32 %v191, %v901
      %v903 = vand.u32 %v902, 4294901760
      %904 = vmatpush1.msra.mxu0 %v903
      %905 = vmatprep.subr.mxu0 0.0
      %v906 = vand.u32 %v192, 4294901760
      %v907 = vsub.f32 %v192, %v906
      %v908 = vand.u32 %v907, 4294901760
      %909 = vmatpush1.msra.mxu0 %v908
      %910 = vmatprep.subr.mxu0 0.0
      %v911 = vand.u32 %v193, 4294901760
      %v912 = vsub.f32 %v193, %v911
      %v913 = vand.u32 %v912, 4294901760
      %914 = vmatpush1.msra.mxu0 %v913
      %915 = vmatprep.subr.mxu0 0.0
      %v916 = vand.u32 %v194, 4294901760
      %v917 = vsub.f32 %v194, %v916
      %v918 = vand.u32 %v917, 4294901760
      %919 = vmatpush1.msra.mxu0 %v918
      %920 = vmatprep.subr.mxu0 0.0
      %v921 = vand.u32 %v195, 4294901760
      %v922 = vsub.f32 %v195, %v921
      %v923 = vand.u32 %v922, 4294901760
      %924 = vmatpush1.msra.mxu0 %v923
      %925 = vmatprep.subr.mxu0 0.0
      %v926 = vand.u32 %v196, 4294901760
      %v927 = vsub.f32 %v196, %v926
      %v928 = vand.u32 %v927, 4294901760
      %929 = vmatpush1.msra.mxu0 %v928
      %930 = vmatprep.subr.mxu0 0.0
      %v931 = vand.u32 %v197, 4294901760
      %v932 = vsub.f32 %v197, %v931
      %v933 = vand.u32 %v932, 4294901760
      %934 = vmatpush1.msra.mxu0 %v933
      %935 = vmatprep.subr.mxu0 0.0
      %v936 = vand.u32 %v198, 4294901760
      %v937 = vsub.f32 %v198, %v936
      %v938 = vand.u32 %v937, 4294901760
      %939 = vmatpush1.msra.mxu0 %v938
      %940 = vmatprep.subr.mxu0 0.0
      %v941 = vand.u32 %v199, 4294901760
      %v942 = vsub.f32 %v199, %v941
      %v943 = vand.u32 %v942, 4294901760
      %944 = vmatpush1.msra.mxu0 %v943
      %945 = vmatprep.subr.mxu0 0.0
      %v946 = vand.u32 %v200, 4294901760
      %v947 = vsub.f32 %v200, %v946
      %v948 = vand.u32 %v947, 4294901760
      %949 = vmatpush1.msra.mxu0 %v948
      %950 = vmatprep.subr.mxu0 0.0
      %v951 = vand.u32 %v201, 4294901760
      %v952 = vsub.f32 %v201, %v951
      %v953 = vand.u32 %v952, 4294901760
      %954 = vmatpush1.msra.mxu0 %v953
      %955 = vmatprep.subr.mxu0 0.0
      %v956 = vand.u32 %v202, 4294901760
      %v957 = vsub.f32 %v202, %v956
      %v958 = vand.u32 %v957, 4294901760
      %959 = vmatpush1.msra.mxu0 %v958
      %v960 = vand.u32 %v170, 4294901760
      %961 = vmatprep.mubr.f32.mxu0 %v960
      %v962 = vand.u32 %v169, 4294901760
      %963 = vmatmul.mubr.f32.gmra.mrb[0].mxu0 %v962
      %v964 = vpop.f32.mrb[0].mxu0
      %v965 = vadd.f32 %v797, %v964
      %v966 = vpop.f32.mrb[0].mxu0
      %967 = vdwg.mxu0
      %968 = vmatprep.subr.mxu0 0.0
      %v969 = vand.u32 %v171, 4294901760
      %970 = vmatpush1.msra.mxu0 %v969
      %971 = vmatprep.subr.mxu0 0.0
      %v972 = vand.u32 %v172, 4294901760
      %973 = vmatpush1.msra.mxu0 %v972
      %974 = vmatprep.subr.mxu0 0.0
      %v975 = vand.u32 %v173, 4294901760
      %976 = vmatpush1.msra.mxu0 %v975
      %977 = vmatprep.subr.mxu0 0.0
      %v978 = vand.u32 %v174, 4294901760
      %979 = vmatpush1.msra.mxu0 %v978
      %980 = vmatprep.subr.mxu0 0.0
      %v981 = vand.u32 %v175, 4294901760
      %982 = vmatpush1.msra.mxu0 %v981
      %983 = vmatprep.subr.mxu0 0.0
      %v984 = vand.u32 %v176, 4294901760
      %985 = vmatpush1.msra.mxu0 %v984
      %986 = vmatprep.subr.mxu0 0.0
      %v987 = vand.u32 %v177, 4294901760
      %988 = vmatpush1.msra.mxu0 %v987
      %989 = vmatprep.subr.mxu0 0.0
      %v990 = vand.u32 %v178, 4294901760
      %991 = vmatpush1.msra.mxu0 %v990
      %992 = vmatprep.subr.mxu0 0.0
      %v993 = vand.u32 %v179, 4294901760
      %994 = vmatpush1.msra.mxu0 %v993
      %995 = vmatprep.subr.mxu0 0.0
      %v996 = vand.u32 %v180, 4294901760
      %997 = vmatpush1.msra.mxu0 %v996
      %998 = vmatprep.subr.mxu0 0.0
      %v999 = vand.u32 %v181, 4294901760
      %1000 = vmatpush1.msra.mxu0 %v999
      %1001 = vmatprep.subr.mxu0 0.0
      %v1002 = vand.u32 %v182, 4294901760
      %1003 = vmatpush1.msra.mxu0 %v1002
      %1004 = vmatprep.subr.mxu0 0.0
      %v1005 = vand.u32 %v183, 4294901760
      %1006 = vmatpush1.msra.mxu0 %v1005
      %1007 = vmatprep.subr.mxu0 0.0
      %v1008 = vand.u32 %v184, 4294901760
      %1009 = vmatpush1.msra.mxu0 %v1008
      %1010 = vmatprep.subr.mxu0 0.0
      %v1011 = vand.u32 %v185, 4294901760
      %1012 = vmatpush1.msra.mxu0 %v1011
      %1013 = vmatprep.subr.mxu0 0.0
      %v1014 = vand.u32 %v186, 4294901760
      %1015 = vmatpush1.msra.mxu0 %v1014
      %1016 = vmatprep.subr.mxu0 0.0
      %v1017 = vand.u32 %v187, 4294901760
      %1018 = vmatpush1.msra.mxu0 %v1017
      %1019 = vmatprep.subr.mxu0 0.0
      %v1020 = vand.u32 %v188, 4294901760
      %1021 = vmatpush1.msra.mxu0 %v1020
      %1022 = vmatprep.subr.mxu0 0.0
      %v1023 = vand.u32 %v189, 4294901760
      %1024 = vmatpush1.msra.mxu0 %v1023
      %1025 = vmatprep.subr.mxu0 0.0
      %v1026 = vand.u32 %v190, 4294901760
      %1027 = vmatpush1.msra.mxu0 %v1026
      %1028 = vmatprep.subr.mxu0 0.0
      %v1029 = vand.u32 %v191, 4294901760
      %1030 = vmatpush1.msra.mxu0 %v1029
      %1031 = vmatprep.subr.mxu0 0.0
      %v1032 = vand.u32 %v192, 4294901760
      %1033 = vmatpush1.msra.mxu0 %v1032
      %1034 = vmatprep.subr.mxu0 0.0
      %v1035 = vand.u32 %v193, 4294901760
      %1036 = vmatpush1.msra.mxu0 %v1035
      %1037 = vmatprep.subr.mxu0 0.0
      %v1038 = vand.u32 %v194, 4294901760
      %1039 = vmatpush1.msra.mxu0 %v1038
      %1040 = vmatprep.subr.mxu0 0.0
      %v1041 = vand.u32 %v195, 4294901760
      %1042 = vmatpush1.msra.mxu0 %v1041
      %1043 = vmatprep.subr.mxu0 0.0
      %v1044 = vand.u32 %v196, 4294901760
      %1045 = vmatpush1.msra.mxu0 %v1044
      %1046 = vmatprep.subr.mxu0 0.0
      %v1047 = vand.u32 %v197, 4294901760
      %1048 = vmatpush1.msra.mxu0 %v1047
      %1049 = vmatprep.subr.mxu0 0.0
      %v1050 = vand.u32 %v198, 4294901760
      %1051 = vmatpush1.msra.mxu0 %v1050
      %1052 = vmatprep.subr.mxu0 0.0
      %v1053 = vand.u32 %v199, 4294901760
      %1054 = vmatpush1.msra.mxu0 %v1053
      %1055 = vmatprep.subr.mxu0 0.0
      %v1056 = vand.u32 %v200, 4294901760
      %1057 = vmatpush1.msra.mxu0 %v1056
      %1058 = vmatprep.subr.mxu0 0.0
      %v1059 = vand.u32 %v201, 4294901760
      %1060 = vmatpush1.msra.mxu0 %v1059
      %1061 = vmatprep.subr.mxu0 0.0
      %v1062 = vand.u32 %v202, 4294901760
      %1063 = vmatpush1.msra.mxu0 %v1062
      %v1064 = vand.u32 %v170, 4294901760
      %1065 = vmatprep.mubr.f32.mxu0 %v1064
      %v1066 = vand.u32 %v169, 4294901760
      %1067 = vmatmul.mubr.f32.gmra.mrb[0].mxu0 %v1066
      %v1068 = vpop.f32.mrb[0].mxu0
      %v1069 = vadd.f32 %v965, %v1068
      %v1070 = vpop.f32.mrb[0].mxu0
      %1071 = vdwg.mxu0
      %1072 = vst [vmem:[%s168] sm:$0xff] %v1069
      %p1073 = scmp.lt.s32.totalorder %s14, 1
      %s1074 = scalar_select %p1073, %s14, 1
      %s1075 = smul.addr %s1074, 8
      %s1076 = scalar_lea.vmem %s3, %s1075
      // Predicated region
      $region33: #{deepspeed_test_m.1} parent=31 // pred_check
        %p1077 = pneg %p100
      $region34: #{deepspeed_test_m.1} parent=31 // pred_check_branch
        %1079 = sbr.rel (%p1077) target = $region36
      $region35: #{deepspeed_test_m.1} parent=31 // pred_region
        _
      $region36: #{deepspeed_test_m.1} parent=31 // pred_fallthru
        _
    $region32: #{deepspeed_test_m.1} parent=5 // pred_fallthru
      _
    %p1080 = scmp.le.s32.totalorder 2, %s9
    // Predicated region
    $region37: #{deepspeed_test_m.1} parent=5 // pred_check
      %p1081 = pneg %p1080
    $region38: #{deepspeed_test_m.1} parent=5 // pred_check_branch
      %1083 = sbr.rel (%p1081) target = $region40
    $region39: #{deepspeed_test_m.1} parent=5 // pred_region
      %s1084 = ssub.s32 %s9, 2
      // Predicated region
      $region41: #{deepspeed_test_m.1} parent=39 // pred_check
        %p1085 = pneg %p106
      $region42: #{deepspeed_test_m.1} parent=39 // pred_check_branch
        %1087 = sbr.rel (%p1085) target = $region44
      $region43: #{deepspeed_test_m.1} parent=39 // pred_region
        %p1088 = scmp.lt.s32.totalorder %s15, 1
        %s1089 = scalar_select %p1088, %s15, 1
        %s1090 = smul.addr %s1089, 8
        %s1091 = scalar_lea.vmem %s3, %s1090
      $region44: #{deepspeed_test_m.1} parent=39 // pred_fallthru
        _
    $region40: #{deepspeed_test_m.1} parent=5 // pred_fallthru
      _
  $region6: #{deepspeed_test_m.1} parent=0 // loop_footer
    %s13 = sadd.s32 1, %s9
  $region7: #{deepspeed_test_m.1} parent=0 // loop_footer_branch
    %8 = sbr.rel target = $region3
  $region8: #{deepspeed_test_m.1} parent=0 // loop_exit
    _

</llo_original>
